<compile_context>
chip_gen: v5e
topology: v5e:2x2
jax: 0.10.0
libtpu: 0.0.40
codegen_flags: <defaults>
</compile_context>

<pallas_src>
import functools
import math

import jax
import jax.numpy as jnp
from jax.experimental import pallas as pl
from jax.experimental.pallas import tpu as pltpu


def _t2v_attention_kernel(x_ref, y_ref, v_ref, o_ref, acc_ref, *, scale):
    """One grid step: one batch element, one L-tile.

    x_ref : (tl, k)   x_date tile
    y_ref : (H,  k)   y_date (full)
    v_ref : (tl, D)   values tile
    o_ref : (H,  D)   output (resident across the L axis)
    acc_ref: (H, D)   f32 VMEM accumulator
    """
    li = pl.program_id(1)

    @pl.when(li == 0)
    def _init():
        acc_ref[...] = jnp.zeros_like(acc_ref)

    x = x_ref[...]       # (tl, k)
    y = y_ref[...]       # (H, k)
    vals = v_ref[...]    # (tl, D)

    # scores[l, h] = sum_e x[l, e] * y[h, e]   -> MXU, f32 accumulation
    scores = jax.lax.dot_general(
        x, y, (((1,), (1,)), ((), ())),
        preferred_element_type=jnp.float32)
    scores = scores * scale                       # (tl, H)

    # softmax over H (last dim), numerically stabilized
    m = jnp.max(scores, axis=-1, keepdims=True)
    e = jnp.exp(scores - m)
    denom = jnp.sum(e, axis=-1, keepdims=True)
    a = e / denom                                 # (tl, H)

    # V[h, d] += sum_l a[l, h] * vals[l, d]   (contract over the tile's L rows)
    acc_ref[...] += jax.lax.dot_general(
        a.astype(vals.dtype), vals, (((0,), (0,)), ((), ())),
        preferred_element_type=jnp.float32)

    @pl.when(li == pl.num_programs(1) - 1)
    def _finalize():
        o_ref[...] = acc_ref[...].astype(o_ref.dtype)


def t2v_full_attention(queries, keys, values, x_date, y_date,
                       scale=None, *, block_l=256):
    """Mirrors T2V_FullAttention.forward.

    queries/keys are unused by the PyTorch forward; accepted for signature parity.
    values: (B, L, D), x_date: (B, L, k), y_date: (B, H, k)  ->  (B, H, D)
    """
    del queries, keys  # not used by the reference forward pass

    B, L, k = x_date.shape
    Bv, S, D = values.shape
    By, H, ky = y_date.shape
    assert Bv == B and By == B and ky == k and S == L, "shape mismatch"

    scale_val = float(scale) if scale is not None else 1.0 / math.sqrt(k)

    # Tile the L (reduction) axis; keep H, D, k whole (lane-dense last dims).
    if L <= block_l:
        tl = L
    else:
        tl = block_l
        assert tl % 8 == 0, "block_l must be a multiple of 8"
    num_l = pl.cdiv(L, tl)
    L_pad = num_l * tl
    if L_pad != L:
        # Zero-padding is exact: padded value rows are zero, so their
        # contribution to A^T @ V vanishes regardless of the padded scores.
        pad = L_pad - L
        x_date = jnp.pad(x_date, ((0, 0), (0, pad), (0, 0)))
        values = jnp.pad(values, ((0, 0), (0, pad), (0, 0)))

    cost = pl.CostEstimate(
        flops=int(2 * B * L_pad * H * k + 2 * B * L_pad * H * D + 4 * B * L_pad * H),
        transcendentals=int(B * L_pad * H),
        bytes_accessed=int(4 * (B * L_pad * (k + D) + B * H * (k + D))),
    )

    kernel = functools.partial(_t2v_attention_kernel, scale=scale_val)

    return pl.pallas_call(
        kernel,
        out_shape=jax.ShapeDtypeStruct((B, H, D), values.dtype),
        grid_spec=pltpu.PrefetchScalarGridSpec(
            num_scalar_prefetch=0,
            grid=(B, num_l),
            in_specs=[
                pl.BlockSpec((None, tl, k), lambda b, l: (b, l, 0)),   # x_date
                pl.BlockSpec((None, H, k), lambda b, l: (b, 0, 0)),    # y_date
                pl.BlockSpec((None, tl, D), lambda b, l: (b, l, 0)),   # values
            ],
            out_specs=pl.BlockSpec((None, H, D), lambda b, l: (b, 0, 0)),
            scratch_shapes=[pltpu.VMEM((H, D), jnp.float32)],
        ),
        compiler_params=pltpu.CompilerParams(
            dimension_semantics=("parallel", "arbitrary"),
        ),
        cost_estimate=cost,
    )(x_date, y_date, values)


def _reference(values, x_date, y_date, scale=None):
    B, L, k = x_date.shape
    s = float(scale) if scale is not None else 1.0 / math.sqrt(k)
    scores = jnp.einsum('ble,bhe->blh', x_date, y_date)
    A = jax.nn.softmax(s * scores, axis=-1)
    return jnp.einsum('ble,blh->bhe', values, A)


if __name__ == "__main__":
    # Small shapes consistent with the module: batch=2, seq(L)=64, date dim k=8,
    # y_date length H=16, value feature D=32.
    B, L, H, K, D = 2, 64, 16, 8, 32
    rng = jax.random.PRNGKey(0)
    kq, kk, kv, kx, ky = jax.random.split(rng, 5)
    queries = jax.random.normal(kq, (B, L, D), dtype=jnp.float32)  # unused by forward
    keys_ = jax.random.normal(kk, (B, L, D), dtype=jnp.float32)    # unused by forward
    values = jax.random.normal(kv, (B, L, D), dtype=jnp.float32)
    x_date = jax.random.normal(kx, (B, L, K), dtype=jnp.float32)
    y_date = jax.random.normal(ky, (B, H, K), dtype=jnp.float32)

    # block_l=16 exercises the multi-step accumulation path (L/16 = 4 tiles).
    out = t2v_full_attention(queries, keys_, values, x_date, y_date, block_l=16)
    out = jax.block_until_ready(out)

    ref = _reference(values, x_date, y_date)
    assert out.shape == (B, H, D)
    assert jnp.allclose(out, ref, atol=1e-4, rtol=1e-3), "mismatch vs reference"
    print("KERNEL_OK")
</pallas_src>

<mosaic_0001>
module attributes {stable_mosaic.version = 11 : i64} {
  func.func @_t2v_attention_kernel(%arg0: i32, %arg1: i32, %arg2: memref<1x16x8xf32, #tpu.memory_space<vmem>>, %arg3: memref<1x16x8xf32, #tpu.memory_space<vmem>>, %arg4: memref<1x16x32xf32, #tpu.memory_space<vmem>>, %arg5: memref<1x16x32xf32, #tpu.memory_space<vmem>>, %arg6: memref<16x32xf32, #tpu.memory_space<vmem>>) attributes {dimension_semantics = [#tpu.dimension_semantics<parallel>, #tpu.dimension_semantics<arbitrary>], iteration_bounds = array<i64: 2, 4>, scalar_prefetch = 0 : i64, scratch_operands = 1 : i64, tpu.core_type = #tpu.core_type<tc>, window_params = [{transform_indices = @transform_0, window_bounds = array<i64: 1, 16, 8>}, {transform_indices = @transform_1, window_bounds = array<i64: 1, 16, 8>}, {transform_indices = @transform_2, window_bounds = array<i64: 1, 16, 32>}, {transform_indices = @transform_3, window_bounds = array<i64: 1, 16, 32>}]} {
    %c0_i32 = arith.constant 0 : i32
    %0 = arith.cmpi eq, %arg1, %c0_i32 : i32
    %1 = arith.extui %0 : i1 to i32
    %c0_i32_0 = arith.constant 0 : i32
    %2 = arith.cmpi ne, %1, %c0_i32_0 : i32
    scf.if %2 {
      %cst_18 = arith.constant 0.000000e+00 : f32
      %28 = vector.broadcast %cst_18 : f32 to vector<16x32xf32>
      %c0_19 = arith.constant 0 : index
      %c0_20 = arith.constant 0 : index
      %29 = vector.load %arg6[%c0_19, %c0_20] : memref<16x32xf32, #tpu.memory_space<vmem>>, vector<16x32xf32>
      tpu.vector_store %arg6[%c0_19, %c0_20], %28 {strides = array<i32>} : memref<16x32xf32, #tpu.memory_space<vmem>>, vector<16x32xf32>,
    } else {
    }
    %c0 = arith.constant 0 : index
    %c0_1 = arith.constant 0 : index
    %c0_2 = arith.constant 0 : index
    %3 = vector.load %arg2[%c0, %c0_1, %c0_2] : memref<1x16x8xf32, #tpu.memory_space<vmem>>, vector<1x16x8xf32>
    %4 = vector.shape_cast %3 : vector<1x16x8xf32> to vector<16x8xf32>
    %c0_3 = arith.constant 0 : index
    %c0_4 = arith.constant 0 : index
    %c0_5 = arith.constant 0 : index
    %5 = vector.load %arg3[%c0_3, %c0_4, %c0_5] : memref<1x16x8xf32, #tpu.memory_space<vmem>>, vector<1x16x8xf32>
    %6 = vector.shape_cast %5 : vector<1x16x8xf32> to vector<16x8xf32>
    %c0_6 = arith.constant 0 : index
    %c0_7 = arith.constant 0 : index
    %c0_8 = arith.constant 0 : index
    %7 = vector.load %arg4[%c0_6, %c0_7, %c0_8] : memref<1x16x32xf32, #tpu.memory_space<vmem>>, vector<1x16x32xf32>
    %8 = vector.shape_cast %7 : vector<1x16x32xf32> to vector<16x32xf32>
    %cst = arith.constant dense<0.000000e+00> : vector<16x16xf32>
    %9 = tpu.matmul %4, %6, %cst {dimension_numbers = #tpu.dot_dimension_numbers<[1], [1], [0], [0], [0, 0, 1, 0], [], []>} : vector<16x8xf32>, vector<16x8xf32>, vector<16x16xf32> -> vector<16x16xf32>
    %cst_9 = arith.constant 0.353553385 : f32
    %10 = vector.broadcast %cst_9 : f32 to vector<16x16xf32>
    %11 = arith.mulf %9, %10 : vector<16x16xf32>
    %cst_10 = arith.constant dense<0xFF800000> : vector<16xf32>
    %12 = vector.multi_reduction <maximumf>, %11, %cst_10 [1] : vector<16x16xf32> to vector<16xf32>
    %13 = vector.shape_cast %12 : vector<16xf32> to vector<16x1xf32>
    %14 = vector.broadcast %13 : vector<16x1xf32> to vector<16x16xf32>
    %15 = arith.subf %11, %14 : vector<16x16xf32>
    %16 = math.exp %15 : vector<16x16xf32>
    %cst_11 = arith.constant dense<0.000000e+00> : vector<16xf32>
    %17 = vector.multi_reduction <add>, %16, %cst_11 [1] : vector<16x16xf32> to vector<16xf32>
    %18 = vector.shape_cast %17 : vector<16xf32> to vector<16x1xf32>
    %19 = vector.broadcast %18 : vector<16x1xf32> to vector<16x16xf32>
    %20 = arith.divf %16, %19 : vector<16x16xf32>
    %c0_12 = arith.constant 0 : index
    %c0_13 = arith.constant 0 : index
    %21 = vector.load %arg6[%c0_12, %c0_13] : memref<16x32xf32, #tpu.memory_space<vmem>>, vector<16x32xf32>
    %cst_14 = arith.constant dense<0.000000e+00> : vector<16x32xf32>
    %22 = tpu.matmul %20, %8, %cst_14 {dimension_numbers = #tpu.dot_dimension_numbers<[0], [0], [1], [1], [0, 1, 1, 1], [], []>} : vector<16x16xf32>, vector<16x32xf32>, vector<16x32xf32> -> vector<16x32xf32>
    %23 = arith.addf %21, %22 : vector<16x32xf32>
    %c0_15 = arith.constant 0 : index
    %c0_16 = arith.constant 0 : index
    %24 = vector.load %arg6[%c0_15, %c0_16] : memref<16x32xf32, #tpu.memory_space<vmem>>, vector<16x32xf32>
    tpu.vector_store %arg6[%c0_15, %c0_16], %23 {strides = array<i32>} : memref<16x32xf32, #tpu.memory_space<vmem>>, vector<16x32xf32>,
    %c3_i32 = arith.constant 3 : i32
    %25 = arith.cmpi eq, %arg1, %c3_i32 : i32
    %26 = arith.extui %25 : i1 to i32
    %c0_i32_17 = arith.constant 0 : i32
    %27 = arith.cmpi ne, %26, %c0_i32_17 : i32
    scf.if %27 {
      %c0_18 = arith.constant 0 : index
      %c0_19 = arith.constant 0 : index
      %28 = vector.load %arg6[%c0_18, %c0_19] : memref<16x32xf32, #tpu.memory_space<vmem>>, vector<16x32xf32>
      %c0_20 = arith.constant 0 : index
      %c0_21 = arith.constant 0 : index
      %c0_22 = arith.constant 0 : index
      %29 = vector.load %arg5[%c0_20, %c0_21, %c0_22] : memref<1x16x32xf32, #tpu.memory_space<vmem>>, vector<1x16x32xf32>
      %30 = vector.shape_cast %29 : vector<1x16x32xf32> to vector<16x32xf32>
      %31 = vector.shape_cast %28 : vector<16x32xf32> to vector<1x16x32xf32>
      tpu.vector_store %arg5[%c0_20, %c0_21, %c0_22], %31 {strides = array<i32>} : memref<1x16x32xf32, #tpu.memory_space<vmem>>, vector<1x16x32xf32>,
    } else {
    }
    return
  }
  func.func @transform_0(%arg0: i32, %arg1: i32) -> (i32, i32, i32) {
    %c0_i32 = arith.constant 0 : i32
    %c0_i32_0 = arith.constant 0 : i32
    return %arg0, %arg1, %c0_i32 : i32, i32, i32
  }
  func.func @transform_1(%arg0: i32, %arg1: i32) -> (i32, i32, i32) {
    %c0_i32 = arith.constant 0 : i32
    %c0_i32_0 = arith.constant 0 : i32
    %c0_i32_1 = arith.constant 0 : i32
    return %arg0, %c0_i32, %c0_i32_0 : i32, i32, i32
  }
  func.func @transform_2(%arg0: i32, %arg1: i32) -> (i32, i32, i32) {
    %c0_i32 = arith.constant 0 : i32
    %c0_i32_0 = arith.constant 0 : i32
    return %arg0, %arg1, %c0_i32 : i32, i32, i32
  }
  func.func @transform_3(%arg0: i32, %arg1: i32) -> (i32, i32, i32) {
    %c0_i32 = arith.constant 0 : i32
    %c0_i32_0 = arith.constant 0 : i32
    %c0_i32_1 = arith.constant 0 : i32
    return %arg0, %c0_i32, %c0_i32_0 : i32, i32, i32
  }
}

</mosaic_0001>

<llo_original>
// kernel: tpu_custom_call.1
$region0: #{tpu_custom_call.1}
  #allocation0 [shape = 'u32[]', space=smem, size = 0x4, offset = 0x4, fixed_abs, tag = 'smem constant byte address 0x4 - core index']
  #allocation1 [shape = 'u32[72,128]{1,0:T(1,128)}', space=vmem, size = 0x9000, scoped, tag = 'internal scratch']
  #allocation2 [shape = 'f32[16,32]{1,0:T(8,128)}', space=vmem, size = 0x2000, scoped, tag = 'scratch operand']
  %s0 = inlined_call_operand.vmem [shape: f32[2,64,8], index: 0, kind: input, shape index: {}]
  %s1 = inlined_call_operand.vmem [shape: f32[2,16,8], index: 1, kind: input, shape index: {}]
  %s2 = inlined_call_operand.vmem [shape: f32[2,64,32], index: 2, kind: input, shape index: {}]
  %s3 = inlined_call_operand.hbm [shape: f32[2,16,32], index: 3, kind: output, shape index: {}]
  %s4 = sld [smem:[#allocation0]]
  $region53: #{tpu_custom_call.1} parent=0
    _
  %s6 = ssub.s32 1, %s4
  %s7 = scalar_select 0, %s6, %s4
  $region1: #{tpu_custom_call.1} parent=0
    #allocation3 [shape = 'u8[16384]{0}', space=vmem, size = 0x4000, scoped, tag = 'output window, operand 0']
    #allocation4 [shape = 's32[2]{0}', space=sflag, size = 0x8, scoped, tag = 'scoped memory for tpu_custom_call.1']
    %8 = vsyncpa [#allocation4], 0
    %s9 = scalar_lea.sflag [#allocation4], 1
    %10 = vsyncpa %s9, 0
    loop: start=0, step=1, limit=10
    $region2: #{tpu_custom_call.1} parent=1 // loop_pre_header
      _
    $region3: #{tpu_custom_call.1} parent=1 // loop_header
      %s12 = sphi 0, %s16
      %p13 = scmp.ge.s32.totalorder %s12, 10
      %s19 = sphi 0, %s31
      %s20 = sphi 0, %s27
      %s21 = sphi 0, %s19
      %s22 = sphi 0, %s20
      %s23 = sphi 0, %s21
      %s24 = sphi 0, %s22
      %s36 = sphi 0, %s38
      %s39 = sphi 0, %s36
      %s40 = sphi 0, %s39
      %s56 = sphi 0, %s40
      %s62 = sphi 0, %s64
      %s65 = sphi 0, %s62
      %s66 = sphi 0, %s65
      %s82 = sphi 0, %s66
      %s90 = sphi 0, %s92
      %s93 = sphi 0, %s90
      %s94 = sphi 0, %s93
      %s110 = sphi 0, %s94
      %s116 = sphi 0, %s118
      %s119 = sphi 0, %s116
      %s120 = sphi 0, %s119
      %s136 = sphi 0, %s120
    $region4: #{tpu_custom_call.1} parent=1 // loop_header_branch
      %15 = sbr.rel (%p13) target = $region8
    $region5: #{tpu_custom_call.1} parent=1 // loop_body
      %s17 = ssub.s32 %s12, 1
      %s18 = ssub.s32 %s12, 2
      %s25 = sadd.s32 1, %s20
      %p26 = scmp.ge.s32.totalorder %s25, 4
      %s27 = scalar_select %p26, 0, %s25
      %s28 = sadd.s32 1, %s19
      %s29 = scalar_select %p26, %s28, %s19
      %p30 = scmp.ge.s32.totalorder %s29, 2
      %s31 = scalar_select %p30, 0, %s29
      %s32 = ssub.s32 %s19, %s31
      %s33 = ssub.s32 %s20, %s27
      %s34 = sor.u32 %s32, %s33
      %p35 = scmp.eq.s32.totalorder %s34, 0
      %s37 = sadd.s32 %s36, 1
      %s38 = scalar_select %p35, %s36, %s37
      %p41 = pneg %p35
      %p42 = scmp.eq.s32.totalorder %s12, 7
      %p43 = por %p41, %p42
      %p44 = scmp.ne.s32.totalorder %s36, %s39
      %p45 = scmp.eq.s32.totalorder %s12, 0
      %p46 = por %p44, %p45
      %p47 = scmp.ne.s32.totalorder %s36, %s39
      %p48 = scmp.eq.s32.totalorder %s17, 7
      %p49 = por %p47, %p48
      %p50 = scmp.ne.s32.totalorder %s39, %s40
      %p51 = scmp.eq.s32.totalorder %s17, 0
      %p52 = por %p50, %p51
      %p53 = scmp.ne.s32.totalorder %s39, %s40
      %p54 = scmp.eq.s32.totalorder %s18, 7
      %p55 = por %p53, %p54
      %p57 = scmp.ne.s32.totalorder %s40, %s56
      %p58 = scmp.eq.s32.totalorder %s18, 0
      %p59 = por %p57, %p58
      %s60 = ssub.s32 %s19, %s31
      %p61 = scmp.eq.s32.totalorder %s60, 0
      %s63 = sadd.s32 %s62, 1
      %s64 = scalar_select %p61, %s62, %s63
      %p67 = pneg %p61
      %p68 = scmp.eq.s32.totalorder %s12, 7
      %p69 = por %p67, %p68
      %p70 = scmp.ne.s32.totalorder %s62, %s65
      %p71 = scmp.eq.s32.totalorder %s12, 0
      %p72 = por %p70, %p71
      %p73 = scmp.ne.s32.totalorder %s62, %s65
      %p74 = scmp.eq.s32.totalorder %s17, 7
      %p75 = por %p73, %p74
      %p76 = scmp.ne.s32.totalorder %s65, %s66
      %p77 = scmp.eq.s32.totalorder %s17, 0
      %p78 = por %p76, %p77
      %p79 = scmp.ne.s32.totalorder %s65, %s66
      %p80 = scmp.eq.s32.totalorder %s18, 7
      %p81 = por %p79, %p80
      %p83 = scmp.ne.s32.totalorder %s66, %s82
      %p84 = scmp.eq.s32.totalorder %s18, 0
      %p85 = por %p83, %p84
      %s86 = ssub.s32 %s19, %s31
      %s87 = ssub.s32 %s20, %s27
      %s88 = sor.u32 %s86, %s87
      %p89 = scmp.eq.s32.totalorder %s88, 0
      %s91 = sadd.s32 %s90, 1
      %s92 = scalar_select %p89, %s90, %s91
      %p95 = pneg %p89
      %p96 = scmp.eq.s32.totalorder %s12, 7
      %p97 = por %p95, %p96
      %p98 = scmp.ne.s32.totalorder %s90, %s93
      %p99 = scmp.eq.s32.totalorder %s12, 0
      %p100 = por %p98, %p99
      %p101 = scmp.ne.s32.totalorder %s90, %s93
      %p102 = scmp.eq.s32.totalorder %s17, 7
      %p103 = por %p101, %p102
      %p104 = scmp.ne.s32.totalorder %s93, %s94
      %p105 = scmp.eq.s32.totalorder %s17, 0
      %p106 = por %p104, %p105
      %p107 = scmp.ne.s32.totalorder %s93, %s94
      %p108 = scmp.eq.s32.totalorder %s18, 7
      %p109 = por %p107, %p108
      %p111 = scmp.ne.s32.totalorder %s94, %s110
      %p112 = scmp.eq.s32.totalorder %s18, 0
      %p113 = por %p111, %p112
      %s114 = ssub.s32 %s19, %s31
      %p115 = scmp.eq.s32.totalorder %s114, 0
      %s117 = sadd.s32 %s116, 1
      %s118 = scalar_select %p115, %s116, %s117
      %p121 = pneg %p115
      %p122 = scmp.eq.s32.totalorder %s12, 7
      %p123 = por %p121, %p122
      %p124 = scmp.ne.s32.totalorder %s116, %s119
      %p125 = scmp.eq.s32.totalorder %s12, 0
      %p126 = por %p124, %p125
      %p127 = scmp.ne.s32.totalorder %s116, %s119
      %p128 = scmp.eq.s32.totalorder %s17, 7
      %p129 = por %p127, %p128
      %p130 = scmp.ne.s32.totalorder %s119, %s120
      %p131 = scmp.eq.s32.totalorder %s17, 0
      %p132 = por %p130, %p131
      %p133 = scmp.ne.s32.totalorder %s119, %s120
      %p134 = scmp.eq.s32.totalorder %s18, 7
      %p135 = por %p133, %p134
      %p137 = scmp.ne.s32.totalorder %s120, %s136
      %p138 = scmp.eq.s32.totalorder %s18, 0
      %p139 = por %p137, %p138
      %p140 = scmp.le.s32.totalorder 1, %s12
      %p141 = scmp.lt.s32.totalorder %s12, 9
      %p142 = pnand %p140, %p141
      %p143 = pneg %p142
      // Predicated region
      $region9: #{tpu_custom_call.1} parent=5 // pred_check
        _
      $region10: #{tpu_custom_call.1} parent=5 // pred_check_branch
        %145 = sbr.rel (%p142) target = $region12
      $region11: #{tpu_custom_call.1} parent=5 // pred_region
        %s146 = ssub.s32 %s12, 1
      $region12: #{tpu_custom_call.1} parent=5 // pred_fallthru
        _
      %p147 = scmp.lt.s32.totalorder %s12, 8
      // Predicated region
      $region13: #{tpu_custom_call.1} parent=5 // pred_check
        %p148 = pneg %p147
      $region14: #{tpu_custom_call.1} parent=5 // pred_check_branch
        %150 = sbr.rel (%p148) target = $region16
      $region15: #{tpu_custom_call.1} parent=5 // pred_region
        // Predicated region
        $region17: #{tpu_custom_call.1} parent=15 // pred_check
          %p151 = pneg %p46
        $region18: #{tpu_custom_call.1} parent=15 // pred_check_branch
          %153 = sbr.rel (%p151) target = $region20
        $region19: #{tpu_custom_call.1} parent=15 // pred_region
          %s154 = smul.u32 2, %s20
          %p155 = scmp.lt.s32.totalorder %s19, 1
          %s156 = scalar_select %p155, %s19, 1
          %p157 = scmp.lt.s32.totalorder %s154, 7
          %s158 = scalar_select %p157, %s154, 7
          %s159 = smul.addr %s156, 8
          %s160 = sadd.s32 %s158, %s159
          %s161 = smul.addr %s160, 8
          %s162 = scalar_lea.vmem %s0, %s161
          %s163 = smul.u32 2, %s20
        $region20: #{tpu_custom_call.1} parent=15 // pred_fallthru
          _
        // Predicated region
        $region21: #{tpu_custom_call.1} parent=15 // pred_check
          %p164 = pneg %p72
        $region22: #{tpu_custom_call.1} parent=15 // pred_check_branch
          %166 = sbr.rel (%p164) target = $region24
        $region23: #{tpu_custom_call.1} parent=15 // pred_region
          %p167 = scmp.lt.s32.totalorder %s19, 1
          %s168 = scalar_select %p167, %s19, 1
          %s169 = smul.addr %s168, 2
          %s170 = smul.addr %s169, 8
          %s171 = scalar_lea.vmem %s1, %s170
        $region24: #{tpu_custom_call.1} parent=15 // pred_fallthru
          _
        // Predicated region
        $region25: #{tpu_custom_call.1} parent=15 // pred_check
          %p172 = pneg %p100
        $region26: #{tpu_custom_call.1} parent=15 // pred_check_branch
          %174 = sbr.rel (%p172) target = $region28
        $region27: #{tpu_custom_call.1} parent=15 // pred_region
          %s175 = smul.u32 2, %s20
          %p176 = scmp.lt.s32.totalorder %s19, 1
          %s177 = scalar_select %p176, %s19, 1
          %p178 = scmp.lt.s32.totalorder %s175, 7
          %s179 = scalar_select %p178, %s175, 7
          %s180 = smul.addr %s177, 8
          %s181 = sadd.s32 %s179, %s180
          %s182 = smul.addr %s181, 8
          %s183 = scalar_lea.vmem %s2, %s182
          %s184 = smul.u32 2, %s20
        $region28: #{tpu_custom_call.1} parent=15 // pred_fallthru
          _
      $region16: #{tpu_custom_call.1} parent=5 // pred_fallthru
        _
      %p185 = scmp.le.s32.totalorder 1, %s12
      %p186 = scmp.lt.s32.totalorder %s12, 9
      %p187 = pnand %p185, %p186
      %p188 = pneg %p187
      // Predicated region
      $region29: #{tpu_custom_call.1} parent=5 // pred_check
        _
      $region30: #{tpu_custom_call.1} parent=5 // pred_check_branch
        %190 = sbr.rel (%p187) target = $region32
      $region31: #{tpu_custom_call.1} parent=5 // pred_region
        %s191 = ssub.s32 %s12, 1
        %s192 = smul.u32 2, %s22
        %p193 = scmp.lt.s32.totalorder %s21, 1
        %s194 = scalar_select %p193, %s21, 1
        %p195 = scmp.lt.s32.totalorder %s192, 7
        %s196 = scalar_select %p195, %s192, 7
        %s197 = smul.addr %s194, 8
        %s198 = sadd.s32 %s196, %s197
        %s199 = smul.addr %s198, 8
        %s200 = scalar_lea.vmem %s0, %s199
        %p201 = pneg %p52
        %p202 = pneg %p49
        %p203 = scmp.lt.s32.totalorder %s21, 1
        %s204 = scalar_select %p203, %s21, 1
        %s205 = smul.addr %s204, 2
        %s206 = smul.addr %s205, 8
        %s207 = scalar_lea.vmem %s1, %s206
        %p208 = pneg %p78
        %p209 = pneg %p75
        %s210 = smul.u32 2, %s22
        %p211 = scmp.lt.s32.totalorder %s21, 1
        %s212 = scalar_select %p211, %s21, 1
        %p213 = scmp.lt.s32.totalorder %s210, 7
        %s214 = scalar_select %p213, %s210, 7
        %s215 = smul.addr %s212, 8
        %s216 = sadd.s32 %s214, %s215
        %s217 = smul.addr %s216, 8
        %s218 = scalar_lea.vmem %s2, %s217
        %p219 = pneg %p106
        %p220 = pneg %p103
        %p221 = pneg %p132
        %p222 = pneg %p129
        %s223 = sand.u32 %s119, 1
        %s224 = scalar_lea.sflag [#allocation4], %s223
        %s225 = sand.u32 %s119, 1
        %s226 = smul.addr %s225, 16
        %s227 = scalar_lea.vmem [#allocation3], %s226
        %s228 = smul.u32 2, %s22
        %p229 = scmp.lt.s32.totalorder %s21, 1
        %s230 = scalar_select %p229, %s21, 1
        %p231 = scmp.lt.s32.totalorder %s228, 7
        %s232 = scalar_select %p231, %s228, 7
        %s233 = smul.addr %s230, 8
        %s234 = sadd.s32 %s232, %s233
        %s235 = smul.addr %s234, 8
        %s236 = scalar_lea.vmem %s0, %s235
        %s237 = smul.u32 2, %s22
        %p238 = scmp.lt.s32.totalorder %s21, 1
        %s239 = scalar_select %p238, %s21, 1
        %s240 = smul.addr %s239, 2
        %s241 = smul.addr %s240, 8
        %s242 = scalar_lea.vmem %s1, %s241
        %s243 = smul.u32 2, %s22
        %p244 = scmp.lt.s32.totalorder %s21, 1
        %s245 = scalar_select %p244, %s21, 1
        %p246 = scmp.lt.s32.totalorder %s243, 7
        %s247 = scalar_select %p246, %s243, 7
        %s248 = smul.addr %s245, 8
        %s249 = sadd.s32 %s247, %s248
        %s250 = smul.addr %s249, 8
        %s251 = scalar_lea.vmem %s2, %s250
        %s252 = smul.u32 2, %s22
        %p253 = scmp.eq.s32.totalorder %s22, 0
        // Predicated region
        $region33: #{tpu_custom_call.1} parent=31 // pred_check
          %p254 = pneg %p253
        $region34: #{tpu_custom_call.1} parent=31 // pred_check_branch
          %256 = sbr.rel (%p254) target = $region36
        $region35: #{tpu_custom_call.1} parent=31 // pred_region
          %vm257 = vcmask 261120
          %258 = vst.msk [vmem:[#allocation2] sm:$0xff] %vm257, 0.0
          %259 = vst.msk [vmem:[#allocation2 + $0x8] sm:$0xff] %vm257, 0.0
        $region36: #{tpu_custom_call.1} parent=31 // pred_fallthru
          _
        %v260 = vld [vmem:[%s236] sm:$0xff]
        %v261 = vld [vmem:[%s236 + $0x8] sm:$0xff]
        %v262 = vld [vmem:[%s242] sm:$0xff]
        %v263 = vld [vmem:[%s242 + $0x8] sm:$0xff]
        %v264 = vld [vmem:[%s251] sm:$0xff]
        %v265 = vld [vmem:[%s251 + $0x8] sm:$0xff]
        %vm266 = vcmask 64512
        %v268 = vsel %vm266, %v260, 0
        %v271 = vsel %vm266, %v261, 0
        %v274 = vsel %vm266, %v262, 0
        %v277 = vsel %vm266, %v263, 0
        %279 = vmatpush.xpose.msra.mxu0 0.0
        %280 = vmatpush.xpose.msra.mxu0 0.0
        %281 = vmatpush.xpose.msra.mxu0 0.0
        %282 = vmatpush.xpose.msra.mxu0 0.0
        %283 = vmatpush.xpose.msra.mxu0 0.0
        %284 = vmatpush.xpose.msra.mxu0 0.0
        %285 = vmatpush.xpose.msra.mxu0 0.0
        %286 = vmatpush.xpose.msra.mxu0 0.0
        %287 = vmatpush.xpose.msra.mxu0 0.0
        %288 = vmatpush.xpose.msra.mxu0 0.0
        %289 = vmatpush.xpose.msra.mxu0 0.0
        %290 = vmatpush.xpose.msra.mxu0 0.0
        %291 = vmatpush.xpose.msra.mxu0 0.0
        %292 = vmatpush.xpose.msra.mxu0 0.0
        %293 = vmatpush.xpose.msra.mxu0 %v277
        %294 = vmatpush.xpose.msra.mxu0 %v274
        %295 = vmatmul.f32.gmra.mxu0 %v268
        %v296 = vpop.f32.mrf.mxu0
        %v297 = vadd.f32 0.0, %v296
        %298 = vmatmul.f32.gmra.mxu0 %v271
        %v299 = vpop.f32.mrf.mxu0
        %v300 = vadd.f32 0.0, %v299
        %301 = vdwg.mxu0
        %v302 = vmul.f32 %v297, 0.35355338
        %v303 = vmul.f32 %v300, 0.35355338
        %vm304 = vcmask 130048
        %v305 = vsel %vm304, %v302, -inf
        %306 = vmax.xlane.f32.xlu0 %v305
        %v307 = vpop.xlane.xlu0 %306
        %v308 = vsel %vm304, %v303, -inf
        %309 = vmax.xlane.f32.xlu0 %v308
        %v310 = vpop.xlane.xlu0 %309
        %v311 = vsub.f32 %v302, %v307
        %v312 = vsub.f32 %v303, %v310
        %v313 = vmul.f32 %v311, 1.442695
        %v314 = vpow.pop %v313
        %v315 = vmul.f32 %v312, 1.442695
        %v316 = vpow.pop %v315
        %v317 = vsel %vm304, %v314, 0.0
        %318 = vadd.xlane.f32.xlu0 %v317
        %v319 = vpop.xlane.xlu0 %318
        %v320 = vsel %vm304, %v316, 0.0
        %321 = vadd.xlane.f32.xlu0 %v320
        %v322 = vpop.xlane.xlu0 %321
        %v323 = vrcp.pop %v319
        %v324 = vmul.f32 %v319, %v323
        %v325 = vsub.f32 1.0, %v324
        %v326 = vmul.f32 %v323, %v325
        %v327 = vadd.f32 %v323, %v326
        %vm328 = vweird.f32 %v319
        %vm329 = vweird.f32 %v323
        %vm330 = vmor %vm328, %vm329
        %v331 = vsel %vm330, %v323, %v327
        %v332 = vand.u32 2147483647, %v319
        %vm333 = vcmp.eq.f32.partialorder %v332, 8.507059e+37
        %v334 = vand.u32 %v319, 2147483648
        %v335 = vor.u32 1.1754944e-38, %v334
        %v336 = vsel %vm333, %v335, %v331
        %v337 = vmul.f32 %v314, %v336
        %v338 = vrcp.pop %v322
        %v339 = vmul.f32 %v322, %v338
        %v340 = vsub.f32 1.0, %v339
        %v341 = vmul.f32 %v338, %v340
        %v342 = vadd.f32 %v338, %v341
        %vm343 = vweird.f32 %v322
        %vm344 = vweird.f32 %v338
        %vm345 = vmor %vm343, %vm344
        %v346 = vsel %vm345, %v338, %v342
        %v347 = vand.u32 2147483647, %v322
        %vm348 = vcmp.eq.f32.partialorder %v347, 8.507059e+37
        %v349 = vand.u32 %v322, 2147483648
        %v350 = vor.u32 1.1754944e-38, %v349
        %v351 = vsel %vm348, %v350, %v346
        %v352 = vmul.f32 %v316, %v351
        %v353 = vld [vmem:[#allocation2] sm:$0xff]
        %v354 = vld [vmem:[#allocation2 + $0x8] sm:$0xff]
        %355 = vxpose.xlu0.b32.start [1/16] %v337, 128
        %356 = vxpose.xlu0.b32.cont [2/16] %v352, 128
        %357 = vxpose.xlu0.b32.cont [3/16] 0.0, 128
        %358 = vxpose.xlu0.b32.cont [4/16] 0.0, 128
        %359 = vxpose.xlu0.b32.cont [5/16] 0.0, 128
        %360 = vxpose.xlu0.b32.cont [6/16] 0.0, 128
        %361 = vxpose.xlu0.b32.cont [7/16] 0.0, 128
        %362 = vxpose.xlu0.b32.cont [8/16] 0.0, 128
        %363 = vxpose.xlu0.b32.cont [9/16] 0.0, 128
        %364 = vxpose.xlu0.b32.cont [10/16] 0.0, 128
        %365 = vxpose.xlu0.b32.cont [11/16] 0.0, 128
        %366 = vxpose.xlu0.b32.cont [12/16] 0.0, 128
        %367 = vxpose.xlu0.b32.cont [13/16] 0.0, 128
        %368 = vxpose.xlu0.b32.cont [14/16] 0.0, 128
        %369 = vxpose.xlu0.b32.cont [15/16] 0.0, 128
        %370 = vxpose.xlu0.b32.end [16/16] 0.0, 128
        %v371 = vpop.trf.xlu0
        %v372 = vpop.trf.xlu0
        %v373 = vpop.trf.xlu0
        %v374 = vpop.trf.xlu0
        %v375 = vpop.trf.xlu0
        %v376 = vpop.trf.xlu0
        %v377 = vpop.trf.xlu0
        %v378 = vpop.trf.xlu0
        %v379 = vpop.trf.xlu0
        %v380 = vpop.trf.xlu0
        %v381 = vpop.trf.xlu0
        %v382 = vpop.trf.xlu0
        %v383 = vpop.trf.xlu0
        %v384 = vpop.trf.xlu0
        %v385 = vpop.trf.xlu0
        %v386 = vpop.trf.xlu0
        %v388 = vsel %vm304, %v371, 0
        %v391 = vsel %vm304, %v372, 0
        %393 = vmatpush.msra.mxu0 0.0
        %394 = vmatpush.msra.mxu0 0.0
        %395 = vmatpush.msra.mxu0 0.0
        %396 = vmatpush.msra.mxu0 0.0
        %397 = vmatpush.msra.mxu0 0.0
        %398 = vmatpush.msra.mxu0 0.0
        %399 = vmatpush.msra.mxu0 0.0
        %400 = vmatpush.msra.mxu0 0.0
        %401 = vmatpush.msra.mxu0 0.0
        %402 = vmatpush.msra.mxu0 0.0
        %403 = vmatpush.msra.mxu0 0.0
        %404 = vmatpush.msra.mxu0 0.0
        %405 = vmatpush.msra.mxu0 0.0
        %406 = vmatpush.msra.mxu0 0.0
        %407 = vmatpush.msra.mxu0 %v265
        %408 = vmatpush.msra.mxu0 %v264
        %409 = vmatmul.f32.gmra.mxu0 %v388
        %v410 = vpop.f32.mrf.mxu0
        %v411 = vadd.f32 0.0, %v410
        %412 = vmatmul.f32.gmra.mxu0 %v391
        %v413 = vpop.f32.mrf.mxu0
        %v414 = vadd.f32 0.0, %v413
        %415 = vdwg.mxu0
        %v416 = vadd.f32 %v353, %v411
        %v417 = vadd.f32 %v354, %v414
        %vm418 = vcmask 261120
        %419 = vst.msk [vmem:[#allocation2] sm:$0xff] %vm418, %v416
        %420 = vst.msk [vmem:[#allocation2 + $0x8] sm:$0xff] %vm418, %v417
        %p421 = scmp.eq.s32.totalorder %s22, 3
        // Predicated region
        $region37: #{tpu_custom_call.1} parent=31 // pred_check
          %p422 = pneg %p421
        $region38: #{tpu_custom_call.1} parent=31 // pred_check_branch
          %424 = sbr.rel (%p422) target = $region40
        $region39: #{tpu_custom_call.1} parent=31 // pred_region
          %v425 = vld [vmem:[#allocation2] sm:$0xff]
          %v426 = vld [vmem:[#allocation2 + $0x8] sm:$0xff]
          %427 = vst.msk [vmem:[%s227] sm:$0xff] %vm418, %v425
          %428 = vst.msk [vmem:[%s227 + $0x8] sm:$0xff] %vm418, %v426
        $region40: #{tpu_custom_call.1} parent=31 // pred_fallthru
          _
        %s429 = sand.u32 %s119, 1
        %s430 = scalar_lea.sflag [#allocation4], %s429
        %s431 = sand.u32 %s119, 1
        %s432 = smul.addr %s431, 16
        %s433 = scalar_lea.vmem [#allocation3], %s432
        // Predicated region
        $region41: #{tpu_custom_call.1} parent=31 // pred_check
          %p434 = pneg %p129
        $region42: #{tpu_custom_call.1} parent=31 // pred_check_branch
          %436 = sbr.rel (%p434) target = $region44
        $region43: #{tpu_custom_call.1} parent=31 // pred_region
          %438 = vsyncadd %s430, 0
          %s439 = smul.addr %s21, 2
          %s440 = smul.addr %s439, 8
          %s441 = scalar_lea.hbm %s3, %s440
          %s442 = sshll.u32 %s433, 4
          %s443 = int_to_ptr.vmem [resolvable:$true] %s442
          %s444 = sshll.u32 %s441, 4
          %s445 = int_to_ptr.hbm [resolvable:$true] %s444
          %450 = dma.vmem_to_hbm [thread:$0]  %s443, 256, %s445, %s430, 128, 128, 8
        $region44: #{tpu_custom_call.1} parent=31 // pred_fallthru
          _
      $region32: #{tpu_custom_call.1} parent=5 // pred_fallthru
        _
      %p451 = scmp.le.s32.totalorder 2, %s12
      // Predicated region
      $region45: #{tpu_custom_call.1} parent=5 // pred_check
        %p452 = pneg %p451
      $region46: #{tpu_custom_call.1} parent=5 // pred_check_branch
        %454 = sbr.rel (%p452) target = $region48
      $region47: #{tpu_custom_call.1} parent=5 // pred_region
        %s455 = ssub.s32 %s12, 2
        // Predicated region
        $region49: #{tpu_custom_call.1} parent=47 // pred_check
          %p456 = pneg %p135
        $region50: #{tpu_custom_call.1} parent=47 // pred_check_branch
          %458 = sbr.rel (%p456) target = $region52
        $region51: #{tpu_custom_call.1} parent=47 // pred_region
          %s459 = sand.u32 %s120, 1
          %s460 = scalar_lea.sflag [#allocation4], %s459
          %s461 = sand.u32 %s120, 1
          %s462 = smul.addr %s461, 16
          %s463 = scalar_lea.vmem [#allocation3], %s462
          %465 = dma.done %s460, 256
        $region52: #{tpu_custom_call.1} parent=47 // pred_fallthru
          _
      $region48: #{tpu_custom_call.1} parent=5 // pred_fallthru
        _
    $region6: #{tpu_custom_call.1} parent=1 // loop_footer
      %s16 = sadd.s32 1, %s12
    $region7: #{tpu_custom_call.1} parent=1 // loop_footer_branch
      %11 = sbr.rel target = $region3
    $region8: #{tpu_custom_call.1} parent=1 // loop_exit
      _
    %466 = vsyncpa [#allocation4], 1
    %s467 = scalar_lea.sflag [#allocation4], 1
    %468 = vsyncpa %s467, 1

</llo_original>
